<compile_context>
chip_gen: v7x
topology: tpu7x:2x2x1
jax: 0.10.0
libtpu: 0.0.40
codegen_flags: <defaults>
</compile_context>

<pallas_src>
import functools

import jax
import jax.numpy as jnp
from jax import lax
from jax.experimental import pallas as pl
from jax.experimental.pallas import tpu as pltpu


def _round_up(a: int, b: int) -> int:
    return (a + b - 1) // b * b


def _derive_vmem_limit(byte_estimate: int) -> int:
    # 2x headroom over the real working set, floored at 8 MiB for compiler
    # scheduling slack, capped at 64 MiB (v7x physical VMEM per TC).
    return int(min(64 << 20, max(2 * byte_estimate, 8 << 20)))


# --------------------------------------------------------------------------
# Kernel 1: fused Q/K/V projection pre-pass (one MXU matmul per seq tile).
# --------------------------------------------------------------------------
def _qkv_proj_kernel(x_ref, w_ref, q_ref, k_ref, v_ref):
    # x_ref: (tile, Dp) bf16, w_ref: (Dp, 3*Hp) bf16 (grid-invariant/resident)
    hp = q_ref.shape[-1]
    qkv = jnp.dot(x_ref[...], w_ref[...], preferred_element_type=jnp.float32)
    q_ref[...] = qkv[:, :hp].astype(q_ref.dtype)          # scale already folded
    k_ref[...] = qkv[:, hp:2 * hp].astype(k_ref.dtype)
    v_ref[...] = qkv[:, 2 * hp:3 * hp].astype(v_ref.dtype)


# --------------------------------------------------------------------------
# Kernel 2: flash attention over pre-computed bf16 Q/K/V.
# --------------------------------------------------------------------------
def _flash_kernel(q_ref, k_ref, v_ref, o_ref, m_scr, l_scr, acc_scr, *,
                  seq_len, tq, tk, has_pad):
    qi = pl.program_id(1)
    ki = pl.program_id(2)

    @pl.when(ki == 0)
    def _init():
        m_scr[...] = jnp.full_like(m_scr, -jnp.inf)
        l_scr[...] = jnp.zeros_like(l_scr)
        acc_scr[...] = jnp.zeros_like(acc_scr)

    def _scores():
        # s = q @ k^T, contracting the head dim of both (bf16 in, f32 acc).
        return lax.dot_general(q_ref[...], k_ref[...],
                               (((1,), (1,)), ((), ())),
                               preferred_element_type=jnp.float32)

    def _accumulate(s):
        m_prev = m_scr[...]
        m_new = jnp.maximum(m_prev, s.max(axis=-1, keepdims=True))
        alpha = jnp.exp(m_prev - m_new)
        p = jnp.exp(s - m_new)
        l_scr[...] = alpha * l_scr[...] + p.sum(axis=-1, keepdims=True)
        acc_scr[...] = alpha * acc_scr[...] + jnp.dot(
            p.astype(jnp.bfloat16), v_ref[...],
            preferred_element_type=jnp.float32)
        m_scr[...] = m_new

    # Interior blocks (strictly below the diagonal): no mask work at all.
    @pl.when(ki < qi)
    def _interior():
        _accumulate(_scores())

    # Diagonal block: causal mask (+ padding mask only if Tp != T, static).
    @pl.when(ki == qi)
    def _diagonal():
        s = _scores()
        row = qi * tq + lax.broadcasted_iota(jnp.int32, (tq, tk), 0)
        col = ki * tk + lax.broadcasted_iota(jnp.int32, (tq, tk), 1)
        mask = col <= row
        if has_pad:
            mask = mask & (col < seq_len)
        _accumulate(jnp.where(mask, s, -1e30))

    # Blocks with ki > qi are entirely above the diagonal: no compute, and
    # their K/V DMA is elided by the clamped index_map in the wrapper.

    @pl.when(ki == pl.num_programs(2) - 1)
    def _finalize():
        inv_l = pl.reciprocal(l_scr[...], approx=True)
        o_ref[...] = (acc_scr[...] * inv_l).astype(o_ref.dtype)


# --------------------------------------------------------------------------
# One-time parameter packing (hoisted out of the per-call path).
# --------------------------------------------------------------------------
def prepare_params(wq, wk, wv):
    """Pack Wq|Wk|Wv into one (Dp, 3*Hp) bf16 operand.

    Each weight is (head_size, dim_embed) with nn.Linear semantics
    (y = x @ W.T).  We transpose to (D, H), fold the dim_embed**-0.5 scale
    into the Q columns, zero-pad both dims to multiples of 128 (lane-dense
    MXU tiles) and concatenate along the output axis so the projection is a
    single matmul (N = 3*Hp fills the wide MXU on v6e/v7x).
    """
    head_size, dim_embed = wq.shape
    dp = _round_up(dim_embed, 128)
    hp = _round_up(head_size, 128)
    scale = float(dim_embed) ** -0.5

    def pack(w, s=1.0):
        wt = jnp.asarray(w, jnp.float32).T * s                  # (D, H)
        wt = jnp.pad(wt, ((0, dp - dim_embed), (0, hp - head_size)))
        return wt.astype(jnp.bfloat16)

    return jnp.concatenate([pack(wq, scale), pack(wk), pack(wv)], axis=1)


# --------------------------------------------------------------------------
# Wrapper.
# --------------------------------------------------------------------------
def attention_head(x, w_qkv_packed, *, dim_embed, head_size):
    """x: (B, T, dim_embed) f32. Returns (B, T, head_size) in x.dtype."""
    B, T, D = x.shape
    assert D == dim_embed
    Dp, three_hp = w_qkv_packed.shape
    Hp = three_hp // 3

    # Sequence tile: big tiles once K/V are pre-computed (working set is tiny).
    if T >= 512:
        tile = 512
    elif T >= 256:
        tile = 256
    elif T >= 128:
        tile = 128
    else:
        tile = _round_up(max(T, 8), 8)
    Tp = _round_up(T, tile)
    tq = tk = tile
    has_pad = Tp != T

    # bf16 activations for the streamed operand (halves HBM bytes, no
    # in-kernel casts of x/q/k/v).
    xp = x.astype(jnp.bfloat16)
    if (Tp, Dp) != (T, D):
        xp = jnp.pad(xp, ((0, 0), (0, Tp - T), (0, Dp - D)))

    bf16, f32 = 2, 4
    out_isz = jnp.dtype(x.dtype).itemsize

    # ---- pre-pass: Q, K, V = x @ [Wq*scale | Wk | Wv] ----------------------
    proj_bytes = (2 * tile * Dp * bf16            # x tile, double-buffered
                  + 2 * Dp * 3 * Hp * bf16        # packed weights
                  + 3 * 2 * tile * Hp * bf16)     # q/k/v output tiles
    q, k, v = pl.pallas_call(
        _qkv_proj_kernel,
        out_shape=(jax.ShapeDtypeStruct((B, Tp, Hp), jnp.bfloat16),
                   jax.ShapeDtypeStruct((B, Tp, Hp), jnp.bfloat16),
                   jax.ShapeDtypeStruct((B, Tp, Hp), jnp.bfloat16)),
        grid_spec=pltpu.PrefetchScalarGridSpec(
            num_scalar_prefetch=0,
            grid=(B, Tp // tile),
            in_specs=[
                pl.BlockSpec((None, tile, Dp), lambda b, i: (b, i, 0)),
                # grid-invariant packed weights (DMA'd once, resident)
                pl.BlockSpec((Dp, 3 * Hp), lambda b, i: (0, 0)),
            ],
            out_specs=[
                pl.BlockSpec((None, tile, Hp), lambda b, i: (b, i, 0)),
                pl.BlockSpec((None, tile, Hp), lambda b, i: (b, i, 0)),
                pl.BlockSpec((None, tile, Hp), lambda b, i: (b, i, 0)),
            ],
        ),
        compiler_params=pltpu.CompilerParams(
            dimension_semantics=("parallel", "parallel"),
            vmem_limit_bytes=_derive_vmem_limit(proj_bytes),
        ),
    )(xp, w_qkv_packed)

    # ---- flash attention ---------------------------------------------------
    flash_bytes = (2 * tq * Hp * bf16             # q tile
                   + 2 * 2 * tk * Hp * bf16       # k, v tiles
                   + 2 * tq * Hp * out_isz        # output tile
                   + (2 * tq + tq * Hp) * f32)    # m, l, acc scratch
    kernel = functools.partial(_flash_kernel, seq_len=T, tq=tq, tk=tk,
                               has_pad=has_pad)

    # K/V index_map clamped to min(ki, qi): skipped upper-triangle steps reuse
    # the previous block index, so Pallas elides their DMA entirely.
    kv_index_map = lambda b, qi, ki: (b, jnp.minimum(ki, qi), 0)

    out = pl.pallas_call(
        kernel,
        out_shape=jax.ShapeDtypeStruct((B, Tp, Hp), x.dtype),
        grid_spec=pltpu.PrefetchScalarGridSpec(
            num_scalar_prefetch=0,
            grid=(B, Tp // tq, Tp // tk),
            in_specs=[
                pl.BlockSpec((None, tq, Hp), lambda b, qi, ki: (b, qi, 0)),
                pl.BlockSpec((None, tk, Hp), kv_index_map),
                pl.BlockSpec((None, tk, Hp), kv_index_map),
            ],
            out_specs=pl.BlockSpec((None, tq, Hp),
                                   lambda b, qi, ki: (b, qi, 0)),
            scratch_shapes=[
                pltpu.VMEM((tq, 1), jnp.float32),    # running max m
                pltpu.VMEM((tq, 1), jnp.float32),    # running denom l
                pltpu.VMEM((tq, Hp), jnp.float32),   # output accumulator
            ],
        ),
        compiler_params=pltpu.CompilerParams(
            dimension_semantics=("parallel", "parallel", "arbitrary"),
            vmem_limit_bytes=_derive_vmem_limit(flash_bytes),
        ),
    )(q, k, v)

    head_size_out = out[:, :T, :head_size]
    return head_size_out


def init_params(key, dim_embed, head_size):
    """Mirrors nn.Linear(dim_embed, head_size, bias=False) default init."""
    kq, kk, kv = jax.random.split(key, 3)
    bound = 1.0 / (dim_embed ** 0.5)
    wq = jax.random.uniform(kq, (head_size, dim_embed), jnp.float32, -bound, bound)
    wk = jax.random.uniform(kk, (head_size, dim_embed), jnp.float32, -bound, bound)
    wv = jax.random.uniform(kv, (head_size, dim_embed), jnp.float32, -bound, bound)
    return wq, wk, wv


def _reference(x, wq, wk, wv):
    B, T, D = x.shape
    q = jnp.einsum("btd,hd->bth", x, wq)
    k = jnp.einsum("btd,hd->bth", x, wk)
    v = jnp.einsum("btd,hd->bth", x, wv)
    s = jnp.einsum("bqh,bkh->bqk", q, k) * (D ** -0.5)
    mask = jnp.tril(jnp.ones((T, T), dtype=bool))
    s = jnp.where(mask[None], s, -jnp.inf)
    w = jax.nn.softmax(s, axis=-1)
    return jnp.einsum("bqk,bkh->bqh", w, v)


if __name__ == "__main__":
    B, T, D, HS = 2, 8, 32, 16     # batch, seq, dim_embed, head_size
    key = jax.random.PRNGKey(0)
    kx, kp = jax.random.split(key)
    x = jax.random.normal(kx, (B, T, D), jnp.float32)
    wq, wk, wv = init_params(kp, D, HS)
    packed = prepare_params(wq, wk, wv)     # one-time setup, not per-call

    out = attention_head(x, packed, dim_embed=D, head_size=HS)
    out = jax.block_until_ready(out)

    ref = _reference(x, wq, wk, wv)
    assert out.shape == (B, T, HS)
    max_err = float(jnp.max(jnp.abs(out - ref)))
    assert jnp.allclose(out, ref, atol=2e-2, rtol=2e-2), (
        f"mismatch vs reference, max abs err = {max_err}")
    print("KERNEL_OK")
</pallas_src>

<mosaic_0001>
module attributes {stable_mosaic.version = 11 : i64} {
  func.func @_qkv_proj_kernel(%arg0: i32, %arg1: i32, %arg2: memref<1x8x128xbf16, #tpu.memory_space<vmem>>, %arg3: memref<128x384xbf16, #tpu.memory_space<vmem>>, %arg4: memref<1x8x128xbf16, #tpu.memory_space<vmem>>, %arg5: memref<1x8x128xbf16, #tpu.memory_space<vmem>>, %arg6: memref<1x8x128xbf16, #tpu.memory_space<vmem>>) attributes {dimension_semantics = [#tpu.dimension_semantics<parallel>, #tpu.dimension_semantics<parallel>], iteration_bounds = array<i64: 2, 1>, scalar_prefetch = 0 : i64, scratch_operands = 0 : i64, tpu.core_type = #tpu.core_type<tc>, window_params = [{transform_indices = @transform_0, window_bounds = array<i64: 1, 8, 128>}, {pipeline_mode = #tpu.pipeline_mode<synchronous>, transform_indices = @transform_1, window_bounds = array<i64: 128, 384>}, {transform_indices = @transform_2, window_bounds = array<i64: 1, 8, 128>}, {transform_indices = @transform_3, window_bounds = array<i64: 1, 8, 128>}, {transform_indices = @transform_4, window_bounds = array<i64: 1, 8, 128>}]} {
    %c0 = arith.constant 0 : index
    %c0_0 = arith.constant 0 : index
    %c0_1 = arith.constant 0 : index
    %0 = vector.load %arg2[%c0, %c0_0, %c0_1] : memref<1x8x128xbf16, #tpu.memory_space<vmem>>, vector<1x8x128xbf16>
    %1 = vector.shape_cast %0 : vector<1x8x128xbf16> to vector<8x128xbf16>
    %c0_2 = arith.constant 0 : index
    %c0_3 = arith.constant 0 : index
    %2 = vector.load %arg3[%c0_2, %c0_3] : memref<128x384xbf16, #tpu.memory_space<vmem>>, vector<128x384xbf16>
    %cst = arith.constant dense<0.000000e+00> : vector<8x384xf32>
    %3 = tpu.matmul %1, %2, %cst {dimension_numbers = #tpu.dot_dimension_numbers<[1], [0], [0], [1], [0, 0, 1, 1], [], []>} : vector<8x128xbf16>, vector<128x384xbf16>, vector<8x384xf32> -> vector<8x384xf32>
    %4 = vector.extract_strided_slice %3 {offsets = [0, 0], sizes = [8, 128], strides = [1, 1]} : vector<8x384xf32> to vector<8x128xf32>
    %5 = arith.truncf %4 : vector<8x128xf32> to vector<8x128xbf16>
    %c0_4 = arith.constant 0 : index
    %c0_5 = arith.constant 0 : index
    %c0_6 = arith.constant 0 : index
    %6 = vector.load %arg4[%c0_4, %c0_5, %c0_6] : memref<1x8x128xbf16, #tpu.memory_space<vmem>>, vector<1x8x128xbf16>
    %7 = vector.shape_cast %6 : vector<1x8x128xbf16> to vector<8x128xbf16>
    %8 = vector.shape_cast %5 : vector<8x128xbf16> to vector<1x8x128xbf16>
    tpu.vector_store %arg4[%c0_4, %c0_5, %c0_6], %8 {strides = array<i32>} : memref<1x8x128xbf16, #tpu.memory_space<vmem>>, vector<1x8x128xbf16>,
    %9 = vector.extract_strided_slice %3 {offsets = [0, 128], sizes = [8, 128], strides = [1, 1]} : vector<8x384xf32> to vector<8x128xf32>
    %10 = arith.truncf %9 : vector<8x128xf32> to vector<8x128xbf16>
    %c0_7 = arith.constant 0 : index
    %c0_8 = arith.constant 0 : index
    %c0_9 = arith.constant 0 : index
    %11 = vector.load %arg5[%c0_7, %c0_8, %c0_9] : memref<1x8x128xbf16, #tpu.memory_space<vmem>>, vector<1x8x128xbf16>
    %12 = vector.shape_cast %11 : vector<1x8x128xbf16> to vector<8x128xbf16>
    %13 = vector.shape_cast %10 : vector<8x128xbf16> to vector<1x8x128xbf16>
    tpu.vector_store %arg5[%c0_7, %c0_8, %c0_9], %13 {strides = array<i32>} : memref<1x8x128xbf16, #tpu.memory_space<vmem>>, vector<1x8x128xbf16>,
    %14 = vector.extract_strided_slice %3 {offsets = [0, 256], sizes = [8, 128], strides = [1, 1]} : vector<8x384xf32> to vector<8x128xf32>
    %15 = arith.truncf %14 : vector<8x128xf32> to vector<8x128xbf16>
    %c0_10 = arith.constant 0 : index
    %c0_11 = arith.constant 0 : index
    %c0_12 = arith.constant 0 : index
    %16 = vector.load %arg6[%c0_10, %c0_11, %c0_12] : memref<1x8x128xbf16, #tpu.memory_space<vmem>>, vector<1x8x128xbf16>
    %17 = vector.shape_cast %16 : vector<1x8x128xbf16> to vector<8x128xbf16>
    %18 = vector.shape_cast %15 : vector<8x128xbf16> to vector<1x8x128xbf16>
    tpu.vector_store %arg6[%c0_10, %c0_11, %c0_12], %18 {strides = array<i32>} : memref<1x8x128xbf16, #tpu.memory_space<vmem>>, vector<1x8x128xbf16>,
    return
  }
  func.func @transform_0(%arg0: i32, %arg1: i32) -> (i32, i32, i32) {
    %c0_i32 = arith.constant 0 : i32
    %c0_i32_0 = arith.constant 0 : i32
    return %arg0, %arg1, %c0_i32 : i32, i32, i32
  }
  func.func @transform_1(%arg0: i32, %arg1: i32) -> (i32, i32) {
    %c0_i32 = arith.constant 0 : i32
    %c0_i32_0 = arith.constant 0 : i32
    %c0_i32_1 = arith.constant 0 : i32
    return %c0_i32, %c0_i32_0 : i32, i32
  }
  func.func @transform_2(%arg0: i32, %arg1: i32) -> (i32, i32, i32) {
    %c0_i32 = arith.constant 0 : i32
    %c0_i32_0 = arith.constant 0 : i32
    return %arg0, %arg1, %c0_i32 : i32, i32, i32
  }
  func.func @transform_3(%arg0: i32, %arg1: i32) -> (i32, i32, i32) {
    %c0_i32 = arith.constant 0 : i32
    %c0_i32_0 = arith.constant 0 : i32
    return %arg0, %arg1, %c0_i32 : i32, i32, i32
  }
  func.func @transform_4(%arg0: i32, %arg1: i32) -> (i32, i32, i32) {
    %c0_i32 = arith.constant 0 : i32
    %c0_i32_0 = arith.constant 0 : i32
    return %arg0, %arg1, %c0_i32 : i32, i32, i32
  }
}

</mosaic_0001>

<llo_original>
// kernel: tpu_custom_call.1
$region0: #{tpu_custom_call.1}
  #allocation0 [shape = 'u32[]', space=smem, size = 0x4, offset = 0x4, fixed_abs, tag = 'smem constant byte address 0x4 - core index']
  #allocation1 [shape = 'u32[144,128]{1,0:T(1,128)}', space=vmem, size = 0x12000, scoped, tag = 'internal scratch']
  %s0 = inlined_call_operand.hbm [shape: bf16[2,8,128], index: 0, kind: input, shape index: {}]
  %s1 = inlined_call_operand.hbm [shape: bf16[128,384], index: 1, kind: input, shape index: {}]
  %s2 = inlined_call_operand.hbm [shape: bf16[2,8,128], index: 2, kind: output, shape index: {0}]
  %s3 = inlined_call_operand.hbm [shape: bf16[2,8,128], index: 3, kind: output, shape index: {1}]
  %s4 = inlined_call_operand.hbm [shape: bf16[2,8,128], index: 4, kind: output, shape index: {2}]
  %5 = xla_tuple %s2, %s3, %s4
  %s6 = sld [smem:[#allocation0]]
  $region65: #{tpu_custom_call.1} parent=0
    _
  %s8 = ssub.s32 1, %s6
  %s9 = scalar_select 0, %s8, %s6
  $region1: #{tpu_custom_call.1} parent=0
    #allocation2 [shape = 'u8[4096]{0}', space=vmem, size = 0x1000, scoped, tag = 'input window, operand 0']
    #allocation3 [shape = 's32[2]{0}', space=sflag, size = 0x8, scoped, tag = 'scoped memory for tpu_custom_call.1']
    #allocation4 [shape = 's32[2]{0}', space=sflag, size = 0x8, scoped, tag = 'scoped memory for tpu_custom_call.1']
    #allocation5 [shape = 'u8[98304]{0}', space=vmem, size = 0x18000, scoped, tag = 'input window, operand 1, single buffered']
    #allocation6 [shape = 's32[1]{0}', space=sflag, size = 0x4, scoped, tag = 'scoped memory for tpu_custom_call.1']
    #allocation7 [shape = 'u8[4096]{0}', space=vmem, size = 0x1000, scoped, tag = 'output window, operand 0']
    #allocation8 [shape = 'u8[4096]{0}', space=vmem, size = 0x1000, scoped, tag = 'output window, operand 1']
    #allocation9 [shape = 's32[2]{0}', space=sflag, size = 0x8, scoped, tag = 'scoped memory for tpu_custom_call.1']
    #allocation10 [shape = 'u8[4096]{0}', space=vmem, size = 0x1000, scoped, tag = 'output window, operand 2']
    %10 = vsyncpa [#allocation3], 0
    %s11 = scalar_lea.sflag [#allocation3], 1
    %12 = vsyncpa %s11, 0
    %13 = vsyncpa [#allocation6], 0
    %14 = vsyncpa [#allocation4], 0
    %s15 = scalar_lea.sflag [#allocation4], 1
    %16 = vsyncpa %s15, 0
    %17 = vsyncpa [#allocation9], 0
    %s18 = scalar_lea.sflag [#allocation9], 1
    %19 = vsyncpa %s18, 0
    loop: start=0, step=1, limit=4
    $region2: #{tpu_custom_call.1} parent=1 // loop_pre_header
      _
    $region3: #{tpu_custom_call.1} parent=1 // loop_header
      %s21 = sphi 0, %s25
      %p22 = scmp.ge.s32.totalorder %s21, 4
      %s28 = sphi 0, %s40
      %s29 = sphi 0, %s36
      %s30 = sphi 0, %s28
      %s31 = sphi 0, %s29
      %s32 = sphi 0, %s30
      %s33 = sphi 0, %s31
      %s45 = sphi 0, %s47
      %s48 = sphi 0, %s45
      %s49 = sphi 0, %s48
      %s65 = sphi 0, %s49
      %s69 = sphi 0, %s69
      %s71 = sphi 0, %s69
      %s72 = sphi 0, %s71
      %s86 = sphi 0, %s72
      %s94 = sphi 0, %s96
      %s97 = sphi 0, %s94
      %s98 = sphi 0, %s97
      %s114 = sphi 0, %s98
      %s122 = sphi 0, %s124
      %s125 = sphi 0, %s122
      %s126 = sphi 0, %s125
      %s142 = sphi 0, %s126
      %s150 = sphi 0, %s152
      %s153 = sphi 0, %s150
      %s154 = sphi 0, %s153
      %s170 = sphi 0, %s154
    $region4: #{tpu_custom_call.1} parent=1 // loop_header_branch
      %24 = sbr.rel (%p22) target = $region8
    $region5: #{tpu_custom_call.1} parent=1 // loop_body
      %s26 = ssub.s32 %s21, 1
      %s27 = ssub.s32 %s21, 2
      %s34 = sadd.s32 1, %s29
      %p35 = scmp.ge.s32.totalorder %s34, 1
      %s36 = scalar_select %p35, 0, %s34
      %s37 = sadd.s32 1, %s28
      %s38 = scalar_select %p35, %s37, %s28
      %p39 = scmp.ge.s32.totalorder %s38, 2
      %s40 = scalar_select %p39, 0, %s38
      %s41 = ssub.s32 %s28, %s40
      %s42 = ssub.s32 %s29, %s36
      %s43 = sor.u32 %s41, %s42
      %p44 = scmp.eq.s32.totalorder %s43, 0
      %s46 = sadd.s32 %s45, 1
      %s47 = scalar_select %p44, %s45, %s46
      %p50 = pneg %p44
      %p51 = scmp.eq.s32.totalorder %s21, 1
      %p52 = por %p50, %p51
      %p53 = scmp.ne.s32.totalorder %s45, %s48
      %p54 = scmp.eq.s32.totalorder %s21, 0
      %p55 = por %p53, %p54
      %p56 = scmp.ne.s32.totalorder %s45, %s48
      %p57 = scmp.eq.s32.totalorder %s26, 1
      %p58 = por %p56, %p57
      %p59 = scmp.ne.s32.totalorder %s48, %s49
      %p60 = scmp.eq.s32.totalorder %s26, 0
      %p61 = por %p59, %p60
      %p62 = scmp.ne.s32.totalorder %s48, %s49
      %p63 = scmp.eq.s32.totalorder %s27, 1
      %p64 = por %p62, %p63
      %p66 = scmp.ne.s32.totalorder %s49, %s65
      %p67 = scmp.eq.s32.totalorder %s27, 0
      %p68 = por %p66, %p67
      %s70 = sadd.s32 %s69, 1
      %p73 = scmp.eq.s32.totalorder %s21, 1
      %p74 = scmp.ne.s32.totalorder %s69, %s71
      %p75 = scmp.eq.s32.totalorder %s21, 0
      %p76 = por %p74, %p75
      %p77 = scmp.ne.s32.totalorder %s69, %s71
      %p78 = scmp.eq.s32.totalorder %s26, 1
      %p79 = por %p77, %p78
      %p80 = scmp.ne.s32.totalorder %s71, %s72
      %p81 = scmp.eq.s32.totalorder %s26, 0
      %p82 = por %p80, %p81
      %p83 = scmp.ne.s32.totalorder %s71, %s72
      %p84 = scmp.eq.s32.totalorder %s27, 1
      %p85 = por %p83, %p84
      %p87 = scmp.ne.s32.totalorder %s72, %s86
      %p88 = scmp.eq.s32.totalorder %s27, 0
      %p89 = por %p87, %p88
      %s90 = ssub.s32 %s28, %s40
      %s91 = ssub.s32 %s29, %s36
      %s92 = sor.u32 %s90, %s91
      %p93 = scmp.eq.s32.totalorder %s92, 0
      %s95 = sadd.s32 %s94, 1
      %s96 = scalar_select %p93, %s94, %s95
      %p99 = pneg %p93
      %p100 = scmp.eq.s32.totalorder %s21, 1
      %p101 = por %p99, %p100
      %p102 = scmp.ne.s32.totalorder %s94, %s97
      %p103 = scmp.eq.s32.totalorder %s21, 0
      %p104 = por %p102, %p103
      %p105 = scmp.ne.s32.totalorder %s94, %s97
      %p106 = scmp.eq.s32.totalorder %s26, 1
      %p107 = por %p105, %p106
      %p108 = scmp.ne.s32.totalorder %s97, %s98
      %p109 = scmp.eq.s32.totalorder %s26, 0
      %p110 = por %p108, %p109
      %p111 = scmp.ne.s32.totalorder %s97, %s98
      %p112 = scmp.eq.s32.totalorder %s27, 1
      %p113 = por %p111, %p112
      %p115 = scmp.ne.s32.totalorder %s98, %s114
      %p116 = scmp.eq.s32.totalorder %s27, 0
      %p117 = por %p115, %p116
      %s118 = ssub.s32 %s28, %s40
      %s119 = ssub.s32 %s29, %s36
      %s120 = sor.u32 %s118, %s119
      %p121 = scmp.eq.s32.totalorder %s120, 0
      %s123 = sadd.s32 %s122, 1
      %s124 = scalar_select %p121, %s122, %s123
      %p127 = pneg %p121
      %p128 = scmp.eq.s32.totalorder %s21, 1
      %p129 = por %p127, %p128
      %p130 = scmp.ne.s32.totalorder %s122, %s125
      %p131 = scmp.eq.s32.totalorder %s21, 0
      %p132 = por %p130, %p131
      %p133 = scmp.ne.s32.totalorder %s122, %s125
      %p134 = scmp.eq.s32.totalorder %s26, 1
      %p135 = por %p133, %p134
      %p136 = scmp.ne.s32.totalorder %s125, %s126
      %p137 = scmp.eq.s32.totalorder %s26, 0
      %p138 = por %p136, %p137
      %p139 = scmp.ne.s32.totalorder %s125, %s126
      %p140 = scmp.eq.s32.totalorder %s27, 1
      %p141 = por %p139, %p140
      %p143 = scmp.ne.s32.totalorder %s126, %s142
      %p144 = scmp.eq.s32.totalorder %s27, 0
      %p145 = por %p143, %p144
      %s146 = ssub.s32 %s28, %s40
      %s147 = ssub.s32 %s29, %s36
      %s148 = sor.u32 %s146, %s147
      %p149 = scmp.eq.s32.totalorder %s148, 0
      %s151 = sadd.s32 %s150, 1
      %s152 = scalar_select %p149, %s150, %s151
      %p155 = pneg %p149
      %p156 = scmp.eq.s32.totalorder %s21, 1
      %p157 = por %p155, %p156
      %p158 = scmp.ne.s32.totalorder %s150, %s153
      %p159 = scmp.eq.s32.totalorder %s21, 0
      %p160 = por %p158, %p159
      %p161 = scmp.ne.s32.totalorder %s150, %s153
      %p162 = scmp.eq.s32.totalorder %s26, 1
      %p163 = por %p161, %p162
      %p164 = scmp.ne.s32.totalorder %s153, %s154
      %p165 = scmp.eq.s32.totalorder %s26, 0
      %p166 = por %p164, %p165
      %p167 = scmp.ne.s32.totalorder %s153, %s154
      %p168 = scmp.eq.s32.totalorder %s27, 1
      %p169 = por %p167, %p168
      %p171 = scmp.ne.s32.totalorder %s154, %s170
      %p172 = scmp.eq.s32.totalorder %s27, 0
      %p173 = por %p171, %p172
      %p174 = scmp.le.s32.totalorder 1, %s21
      %p175 = scmp.lt.s32.totalorder %s21, 3
      %p176 = pnand %p174, %p175
      %p177 = pneg %p176
      // Predicated region
      $region9: #{tpu_custom_call.1} parent=5 // pred_check
        _
      $region10: #{tpu_custom_call.1} parent=5 // pred_check_branch
        %179 = sbr.rel (%p176) target = $region12
      $region11: #{tpu_custom_call.1} parent=5 // pred_region
        %s180 = ssub.s32 %s21, 1
        // Predicated region
        $region13: #{tpu_custom_call.1} parent=11 // pred_check
          %p181 = pneg %p82
        $region14: #{tpu_custom_call.1} parent=11 // pred_check_branch
          %183 = sbr.rel (%p181) target = $region16
        $region15: #{tpu_custom_call.1} parent=11 // pred_region
          %s185 = ssub.s32 3072, 3072
          %186 = vsyncadd [#allocation6], %s185
          %s187 = sshll.u32 [#allocation5], 4
          %s188 = int_to_ptr.vmem [resolvable:$true] %s187
          %193 = dma.hbm_to_vmem [thread:$0]  %s1, 3072, %s188, [#allocation6], 192, 192, 12
        $region16: #{tpu_custom_call.1} parent=11 // pred_fallthru
          _
      $region12: #{tpu_custom_call.1} parent=5 // pred_fallthru
        _
      %p194 = scmp.lt.s32.totalorder %s21, 2
      // Predicated region
      $region17: #{tpu_custom_call.1} parent=5 // pred_check
        %p195 = pneg %p194
      $region18: #{tpu_custom_call.1} parent=5 // pred_check_branch
        %197 = sbr.rel (%p195) target = $region20
      $region19: #{tpu_custom_call.1} parent=5 // pred_region
        // Predicated region
        $region21: #{tpu_custom_call.1} parent=19 // pred_check
          %p198 = pneg %p55
        $region22: #{tpu_custom_call.1} parent=19 // pred_check_branch
          %200 = sbr.rel (%p198) target = $region24
        $region23: #{tpu_custom_call.1} parent=19 // pred_region
          %s201 = sand.u32 %s45, 1
          %s202 = scalar_lea.sflag [#allocation3], %s201
          %s203 = sand.u32 %s45, 1
          %s204 = smul.addr %s203, 4
          %s205 = scalar_lea.vmem [#allocation2], %s204
          %s207 = ssub.s32 64, 64
          %208 = vsyncadd %s202, %s207
          %s209 = sadd.s32 %s29, %s28
          %s210 = smul.addr %s209, 64
          %s211 = scalar_lea.hbm %s0, %s210
          %s213 = sshll.u32 %s205, 4
          %s214 = int_to_ptr.vmem [resolvable:$true] %s213
          %216 = dma.hbm_to_vmem [thread:$0]  %s211, 64, %s214, %s202
        $region24: #{tpu_custom_call.1} parent=19 // pred_fallthru
          _
      $region20: #{tpu_custom_call.1} parent=5 // pred_fallthru
        _
      %p217 = scmp.le.s32.totalorder 1, %s21
      %p218 = scmp.lt.s32.totalorder %s21, 3
      %p219 = pnand %p217, %p218
      %p220 = pneg %p219
      // Predicated region
      $region25: #{tpu_custom_call.1} parent=5 // pred_check
        _
      $region26: #{tpu_custom_call.1} parent=5 // pred_check_branch
        %222 = sbr.rel (%p219) target = $region28
      $region27: #{tpu_custom_call.1} parent=5 // pred_region
        %s223 = ssub.s32 %s21, 1
        %s224 = sand.u32 %s48, 1
        %s225 = scalar_lea.sflag [#allocation3], %s224
        %s226 = sand.u32 %s48, 1
        %s227 = smul.addr %s226, 4
        %s228 = scalar_lea.vmem [#allocation2], %s227
        // Predicated region
        $region29: #{tpu_custom_call.1} parent=27 // pred_check
          %p229 = pneg %p61
        $region30: #{tpu_custom_call.1} parent=27 // pred_check_branch
          %231 = sbr.rel (%p229) target = $region32
        $region31: #{tpu_custom_call.1} parent=27 // pred_region
          %232 = dma.done %s225, 64
        $region32: #{tpu_custom_call.1} parent=27 // pred_fallthru
          _
        // Predicated region
        $region33: #{tpu_custom_call.1} parent=27 // pred_check
          %p233 = pneg %p82
        $region34: #{tpu_custom_call.1} parent=27 // pred_check_branch
          %235 = sbr.rel (%p233) target = $region36
        $region35: #{tpu_custom_call.1} parent=27 // pred_region
          %236 = dma.done [#allocation6], 3072
        $region36: #{tpu_custom_call.1} parent=27 // pred_fallthru
          _
        %s237 = sand.u32 %s48, 1
        %s238 = scalar_lea.sflag [#allocation3], %s237
        %s239 = sand.u32 %s48, 1
        %s240 = smul.addr %s239, 4
        %s241 = scalar_lea.vmem [#allocation2], %s240
        %p242 = pneg %p61
        %p243 = pneg %p58
        %p244 = pneg %p82
        %p245 = pneg %p79
        %p246 = pneg %p110
        %p247 = pneg %p107
        %s248 = sand.u32 %s97, 1
        %s249 = scalar_lea.sflag [#allocation4], %s248
        %s250 = sand.u32 %s97, 1
        %s251 = smul.addr %s250, 4
        %s252 = scalar_lea.vmem [#allocation7], %s251
        %p253 = pneg %p138
        %p254 = pneg %p135
        %s255 = sand.u32 %s26, 1
        %s256 = scalar_lea.sflag [#allocation9], %s255
        %s257 = sand.u32 %s125, 1
        %s258 = smul.addr %s257, 4
        %s259 = scalar_lea.vmem [#allocation8], %s258
        %p260 = pneg %p166
        %p261 = pneg %p163
        %s262 = sand.u32 %s26, 1
        %s263 = scalar_lea.sflag [#allocation9], %s262
        %s264 = sand.u32 %s153, 1
        %s265 = smul.addr %s264, 4
        %s266 = scalar_lea.vmem [#allocation10], %s265
        %v268 = vld [vmem:[%s228] sm:$0xf]
        %v269 = vld [vmem:[#allocation5] sm:$0xff]
        %v270 = vld [vmem:[#allocation5 + $0x8] sm:$0xf]
        %v271 = vld [vmem:[#allocation5 + $0xc] sm:$0xff]
        %v272 = vld [vmem:[#allocation5 + $0x14] sm:$0xf]
        %v273 = vld [vmem:[#allocation5 + $0x18] sm:$0xff]
        %v274 = vld [vmem:[#allocation5 + $0x20] sm:$0xf]
        %v275 = vld [vmem:[#allocation5 + $0x24] sm:$0xff]
        %v276 = vld [vmem:[#allocation5 + $0x2c] sm:$0xf]
        %v277 = vld [vmem:[#allocation5 + $0x30] sm:$0xff]
        %v278 = vld [vmem:[#allocation5 + $0x38] sm:$0xf]
        %v279 = vld [vmem:[#allocation5 + $0x3c] sm:$0xff]
        %v280 = vld [vmem:[#allocation5 + $0x44] sm:$0xf]
        %v281 = vld [vmem:[#allocation5 + $0x48] sm:$0xff]
        %v282 = vld [vmem:[#allocation5 + $0x50] sm:$0xf]
        %v283 = vld [vmem:[#allocation5 + $0x54] sm:$0xff]
        %v284 = vld [vmem:[#allocation5 + $0x5c] sm:$0xf]
        %v285 = vld [vmem:[#allocation5 + $0x60] sm:$0xff]
        %v286 = vld [vmem:[#allocation5 + $0x68] sm:$0xf]
        %v287 = vld [vmem:[#allocation5 + $0x6c] sm:$0xff]
        %v288 = vld [vmem:[#allocation5 + $0x74] sm:$0xf]
        %v289 = vld [vmem:[#allocation5 + $0x78] sm:$0xff]
        %v290 = vld [vmem:[#allocation5 + $0x80] sm:$0xf]
        %v291 = vld [vmem:[#allocation5 + $0x84] sm:$0xff]
        %v292 = vld [vmem:[#allocation5 + $0x8c] sm:$0xf]
        %v293 = vld [vmem:[#allocation5 + $0x90] sm:$0xff]
        %v294 = vld [vmem:[#allocation5 + $0x98] sm:$0xf]
        %v295 = vld [vmem:[#allocation5 + $0x9c] sm:$0xff]
        %v296 = vld [vmem:[#allocation5 + $0xa4] sm:$0xf]
        %v297 = vld [vmem:[#allocation5 + $0xa8] sm:$0xff]
        %v298 = vld [vmem:[#allocation5 + $0xb0] sm:$0xf]
        %v299 = vld [vmem:[#allocation5 + $0xb4] sm:$0xff]
        %v300 = vld [vmem:[#allocation5 + $0xbc] sm:$0xf]
        %v333 = vunpack.c.l.b16 %v269
        %v334 = vunpack.c.h.b16 %v269
        %v335 = vunpack.c.l.b16 %v270
        %v336 = vunpack.c.l.b16 %v271
        %v337 = vunpack.c.h.b16 %v271
        %v338 = vunpack.c.l.b16 %v272
        %v339 = vunpack.c.l.b16 %v273
        %v340 = vunpack.c.h.b16 %v273
        %v341 = vunpack.c.l.b16 %v274
        %v342 = vunpack.c.l.b16 %v275
        %v343 = vunpack.c.h.b16 %v275
        %v344 = vunpack.c.l.b16 %v276
        %v345 = vunpack.c.l.b16 %v277
        %v346 = vunpack.c.h.b16 %v277
        %v347 = vunpack.c.l.b16 %v278
        %v348 = vunpack.c.l.b16 %v279
        %v349 = vunpack.c.h.b16 %v279
        %v350 = vunpack.c.l.b16 %v280
        %v351 = vunpack.c.l.b16 %v281
        %v352 = vunpack.c.h.b16 %v281
        %v353 = vunpack.c.l.b16 %v282
        %v354 = vunpack.c.l.b16 %v283
        %v355 = vunpack.c.h.b16 %v283
        %v356 = vunpack.c.l.b16 %v284
        %v357 = vunpack.c.l.b16 %v285
        %v358 = vunpack.c.h.b16 %v285
        %v359 = vunpack.c.l.b16 %v286
        %v360 = vunpack.c.l.b16 %v287
        %v361 = vunpack.c.h.b16 %v287
        %v362 = vunpack.c.l.b16 %v288
        %v363 = vunpack.c.l.b16 %v289
        %v364 = vunpack.c.h.b16 %v289
        %v365 = vunpack.c.l.b16 %v290
        %v366 = vunpack.c.l.b16 %v291
        %v367 = vunpack.c.h.b16 %v291
        %v368 = vunpack.c.l.b16 %v292
        %v369 = vunpack.c.l.b16 %v293
        %v370 = vunpack.c.h.b16 %v293
        %v371 = vunpack.c.l.b16 %v294
        %v372 = vunpack.c.l.b16 %v295
        %v373 = vunpack.c.h.b16 %v295
        %v374 = vunpack.c.l.b16 %v296
        %v375 = vunpack.c.l.b16 %v297
        %v376 = vunpack.c.h.b16 %v297
        %v377 = vunpack.c.l.b16 %v298
        %v378 = vunpack.c.l.b16 %v299
        %v379 = vunpack.c.h.b16 %v299
        %v380 = vunpack.c.l.b16 %v300
        %v381 = vpack.c.b16 %v336, %v333
        %v382 = vpack.c.b16 %v337, %v334
        %v383 = vpack.c.b16 %v338, %v335
        %v384 = vpack.c.b16 %v342, %v339
        %v385 = vpack.c.b16 %v343, %v340
        %v386 = vpack.c.b16 %v344, %v341
        %v387 = vpack.c.b16 %v348, %v345
        %v388 = vpack.c.b16 %v349, %v346
        %v389 = vpack.c.b16 %v350, %v347
        %v390 = vpack.c.b16 %v354, %v351
        %v391 = vpack.c.b16 %v355, %v352
        %v392 = vpack.c.b16 %v356, %v353
        %v393 = vpack.c.b16 %v360, %v357
        %v394 = vpack.c.b16 %v361, %v358
        %v395 = vpack.c.b16 %v362, %v359
        %v396 = vpack.c.b16 %v366, %v363
        %v397 = vpack.c.b16 %v367, %v364
        %v398 = vpack.c.b16 %v368, %v365
        %v399 = vpack.c.b16 %v372, %v369
        %v400 = vpack.c.b16 %v373, %v370
        %v401 = vpack.c.b16 %v374, %v371
        %v402 = vpack.c.b16 %v378, %v375
        %v403 = vpack.c.b16 %v379, %v376
        %v404 = vpack.c.b16 %v380, %v377
        %429 = vmatprep.subr.bf16.mxu0 %v382
        %430 = vmatpush1.bf16.msra.mxu0 %v381
        %431 = vmatprep.subr.bf16.mxu0 %v385
        %432 = vmatpush1.bf16.msra.mxu0 %v384
        %433 = vmatprep.subr.bf16.mxu0 %v388
        %434 = vmatpush1.bf16.msra.mxu0 %v387
        %435 = vmatprep.subr.bf16.mxu0 %v391
        %436 = vmatpush1.bf16.msra.mxu0 %v390
        %437 = vmatprep.subr.bf16.mxu0 %v394
        %438 = vmatpush1.bf16.msra.mxu0 %v393
        %439 = vmatprep.subr.bf16.mxu0 %v397
        %440 = vmatpush1.bf16.msra.mxu0 %v396
        %441 = vmatprep.subr.bf16.mxu0 %v400
        %442 = vmatpush1.bf16.msra.mxu0 %v399
        %443 = vmatprep.subr.bf16.mxu0 %v403
        %444 = vmatpush1.bf16.msra.mxu0 %v402
        %445 = vmatprep.subr.bf16.mxu0 0
        %446 = vmatpush1.bf16.msra.mxu0 0
        %447 = vmatprep.subr.bf16.mxu0 0
        %448 = vmatpush1.bf16.msra.mxu0 0
        %449 = vmatprep.subr.bf16.mxu0 0
        %450 = vmatpush1.bf16.msra.mxu0 0
        %451 = vmatprep.subr.bf16.mxu0 0
        %452 = vmatpush1.bf16.msra.mxu0 0
        %453 = vmatprep.subr.bf16.mxu0 0
        %454 = vmatpush1.bf16.msra.mxu0 0
        %455 = vmatprep.subr.bf16.mxu0 0
        %456 = vmatpush1.bf16.msra.mxu0 0
        %457 = vmatprep.subr.bf16.mxu0 0
        %458 = vmatpush1.bf16.msra.mxu0 0
        %459 = vmatprep.subr.bf16.mxu0 0
        %460 = vmatpush1.bf16.msra.mxu0 0
        %461 = vmatprep.mubr.bf16.mxu0 0
        %462 = vmatmul.mubr.bf16.gmra.mrb[0].mxu0 %v268
        %v463 = vpop.f32.mrb[0].mxu0
        %v464 = vadd.f32 0.0, %v463
        %v465 = vpop.f32.mrb[0].mxu0
        %v466 = vadd.f32 0.0, %v465
        %v467 = vpop.f32.mrb[0].mxu0
        %v468 = vpop.f32.mrb[0].mxu0
        %469 = vdwg.mxu0
        %470 = vmatprep.subr.bf16.mxu0 0
        %471 = vmatpush1.bf16.msra.mxu0 %v383
        %472 = vmatprep.subr.bf16.mxu0 0
        %473 = vmatpush1.bf16.msra.mxu0 %v386
        %474 = vmatprep.subr.bf16.mxu0 0
        %475 = vmatpush1.bf16.msra.mxu0 %v389
        %476 = vmatprep.subr.bf16.mxu0 0
        %477 = vmatpush1.bf16.msra.mxu0 %v392
        %478 = vmatprep.subr.bf16.mxu0 0
        %479 = vmatpush1.bf16.msra.mxu0 %v395
        %480 = vmatprep.subr.bf16.mxu0 0
        %481 = vmatpush1.bf16.msra.mxu0 %v398
        %482 = vmatprep.subr.bf16.mxu0 0
        %483 = vmatpush1.bf16.msra.mxu0 %v401
        %484 = vmatprep.subr.bf16.mxu0 0
        %485 = vmatpush1.bf16.msra.mxu0 %v404
        %486 = vmatprep.subr.bf16.mxu0 0
        %487 = vmatpush1.bf16.msra.mxu0 0
        %488 = vmatprep.subr.bf16.mxu0 0
        %489 = vmatpush1.bf16.msra.mxu0 0
        %490 = vmatprep.subr.bf16.mxu0 0
        %491 = vmatpush1.bf16.msra.mxu0 0
        %492 = vmatprep.subr.bf16.mxu0 0
        %493 = vmatpush1.bf16.msra.mxu0 0
        %494 = vmatprep.subr.bf16.mxu0 0
        %495 = vmatpush1.bf16.msra.mxu0 0
        %496 = vmatprep.subr.bf16.mxu0 0
        %497 = vmatpush1.bf16.msra.mxu0 0
        %498 = vmatprep.subr.bf16.mxu0 0
        %499 = vmatpush1.bf16.msra.mxu0 0
        %500 = vmatprep.subr.bf16.mxu0 0
        %501 = vmatpush1.bf16.msra.mxu0 0
        %502 = vmatprep.mubr.bf16.mxu0 0
        %503 = vmatmul.mubr.bf16.gmra.mrb[0].mxu0 %v268
        %v504 = vpop.f32.mrb[0].mxu0
        %v505 = vadd.f32 0.0, %v504
        %v506 = vpop.f32.mrb[0].mxu0
        %v507 = vpop.f32.mrb[0].mxu0
        %v508 = vpop.f32.mrb[0].mxu0
        %509 = vdwg.mxu0
        %v510 = vpack.c.bf16 %v464, %v464
        %511 = vst [vmem:[%s252] sm:$0xf] %v510
        %v512 = vpack.c.bf16 %v466, %v466
        %513 = vst [vmem:[%s259] sm:$0xf] %v512
        %v514 = vpack.c.bf16 %v505, %v505
        %515 = vst [vmem:[%s266] sm:$0xf] %v514
        %s516 = sand.u32 %s97, 1
        %s517 = scalar_lea.sflag [#allocation4], %s516
        %s518 = sand.u32 %s97, 1
        %s519 = smul.addr %s518, 4
        %s520 = scalar_lea.vmem [#allocation7], %s519
        %s521 = sand.u32 %s26, 1
        %s522 = scalar_lea.sflag [#allocation9], %s521
        %s523 = sand.u32 %s125, 1
        %s524 = smul.addr %s523, 4
        %s525 = scalar_lea.vmem [#allocation8], %s524
        %s526 = sand.u32 %s26, 1
        %s527 = scalar_lea.sflag [#allocation9], %s526
        %s528 = sand.u32 %s153, 1
        %s529 = smul.addr %s528, 4
        %s530 = scalar_lea.vmem [#allocation10], %s529
        // Predicated region
        $region37: #{tpu_custom_call.1} parent=27 // pred_check
          %p531 = pneg %p107
        $region38: #{tpu_custom_call.1} parent=27 // pred_check_branch
          %533 = sbr.rel (%p531) target = $region40
        $region39: #{tpu_custom_call.1} parent=27 // pred_region
          %s535 = ssub.s32 64, 64
          %536 = vsyncadd %s517, %s535
          %s537 = sadd.s32 %s31, %s30
          %s538 = smul.addr %s537, 64
          %s539 = scalar_lea.hbm %s2, %s538
          %s541 = sshll.u32 %s520, 4
          %s542 = int_to_ptr.vmem [resolvable:$true] %s541
          %544 = dma.vmem_to_hbm [thread:$0]  %s542, 64, %s539, %s517
        $region40: #{tpu_custom_call.1} parent=27 // pred_fallthru
          _
        // Predicated region
        $region41: #{tpu_custom_call.1} parent=27 // pred_check
          %p545 = pneg %p135
        $region42: #{tpu_custom_call.1} parent=27 // pred_check_branch
          %547 = sbr.rel (%p545) target = $region44
        $region43: #{tpu_custom_call.1} parent=27 // pred_region
          %s549 = ssub.s32 64, 64
          %550 = vsyncadd %s522, %s549
          %s551 = sadd.s32 %s31, %s30
          %s552 = smul.addr %s551, 64
          %s553 = scalar_lea.hbm %s3, %s552
          %s555 = sshll.u32 %s525, 4
          %s556 = int_to_ptr.vmem [resolvable:$true] %s555
          %558 = dma.vmem_to_hbm [thread:$0]  %s556, 64, %s553, %s522
        $region44: #{tpu_custom_call.1} parent=27 // pred_fallthru
          _
        // Predicated region
        $region45: #{tpu_custom_call.1} parent=27 // pred_check
          %p559 = pneg %p163
        $region46: #{tpu_custom_call.1} parent=27 // pred_check_branch
          %561 = sbr.rel (%p559) target = $region48
        $region47: #{tpu_custom_call.1} parent=27 // pred_region
          %s563 = ssub.s32 64, 64
          %564 = vsyncadd %s527, %s563
          %s565 = sadd.s32 %s31, %s30
          %s566 = smul.addr %s565, 64
          %s567 = scalar_lea.hbm %s4, %s566
          %s569 = sshll.u32 %s530, 4
          %s570 = int_to_ptr.vmem [resolvable:$true] %s569
          %572 = dma.vmem_to_hbm [thread:$0]  %s570, 64, %s567, %s527
        $region48: #{tpu_custom_call.1} parent=27 // pred_fallthru
          _
      $region28: #{tpu_custom_call.1} parent=5 // pred_fallthru
        _
      %p573 = scmp.le.s32.totalorder 2, %s21
      // Predicated region
      $region49: #{tpu_custom_call.1} parent=5 // pred_check
        %p574 = pneg %p573
      $region50: #{tpu_custom_call.1} parent=5 // pred_check_branch
        %576 = sbr.rel (%p574) target = $region52
      $region51: #{tpu_custom_call.1} parent=5 // pred_region
        %s577 = ssub.s32 %s21, 2
        // Predicated region
        $region53: #{tpu_custom_call.1} parent=51 // pred_check
          %p578 = pneg %p113
        $region54: #{tpu_custom_call.1} parent=51 // pred_check_branch
          %580 = sbr.rel (%p578) target = $region56
        $region55: #{tpu_custom_call.1} parent=51 // pred_region
          %s581 = sand.u32 %s98, 1
          %s582 = scalar_lea.sflag [#allocation4], %s581
          %s583 = sand.u32 %s98, 1
          %s584 = smul.addr %s583, 4
          %s585 = scalar_lea.vmem [#allocation7], %s584
          %586 = dma.done %s582, 64
        $region56: #{tpu_custom_call.1} parent=51 // pred_fallthru
          _
        // Predicated region
        $region57: #{tpu_custom_call.1} parent=51 // pred_check
          %p587 = pneg %p141
        $region58: #{tpu_custom_call.1} parent=51 // pred_check_branch
          %589 = sbr.rel (%p587) target = $region60
        $region59: #{tpu_custom_call.1} parent=51 // pred_region
          %s590 = sand.u32 %s27, 1
          %s591 = scalar_lea.sflag [#allocation9], %s590
          %s592 = sand.u32 %s126, 1
          %s593 = smul.addr %s592, 4
          %s594 = scalar_lea.vmem [#allocation8], %s593
          %595 = dma.done %s591, 64
        $region60: #{tpu_custom_call.1} parent=51 // pred_fallthru
          _
        // Predicated region
        $region61: #{tpu_custom_call.1} parent=51 // pred_check
          %p596 = pneg %p169
        $region62: #{tpu_custom_call.1} parent=51 // pred_check_branch
          %598 = sbr.rel (%p596) target = $region64
        $region63: #{tpu_custom_call.1} parent=51 // pred_region
          %s599 = sand.u32 %s27, 1
          %s600 = scalar_lea.sflag [#allocation9], %s599
          %s601 = sand.u32 %s154, 1
          %s602 = smul.addr %s601, 4
          %s603 = scalar_lea.vmem [#allocation10], %s602
          %604 = dma.done %s600, 64
        $region64: #{tpu_custom_call.1} parent=51 // pred_fallthru
          _
      $region52: #{tpu_custom_call.1} parent=5 // pred_fallthru
        _
    $region6: #{tpu_custom_call.1} parent=1 // loop_footer
      %s25 = sadd.s32 1, %s21
    $region7: #{tpu_custom_call.1} parent=1 // loop_footer_branch
      %20 = sbr.rel target = $region3
    $region8: #{tpu_custom_call.1} parent=1 // loop_exit
      _
    %605 = vsyncpa [#allocation3], 1
    %s606 = scalar_lea.sflag [#allocation3], 1
    %607 = vsyncpa %s606, 1
    %608 = vsyncpa [#allocation6], 1
    %609 = vsyncpa [#allocation4], 1
    %s610 = scalar_lea.sflag [#allocation4], 1
    %611 = vsyncpa %s610, 1
    %612 = vsyncpa [#allocation9], 1
    %s613 = scalar_lea.sflag [#allocation9], 1
    %614 = vsyncpa %s613, 1

</llo_original>
